<compile_context>
chip_gen: v6e
topology: v6e:2x2x1
jax: 0.10.0
libtpu: 0.0.40
codegen_flags: <defaults>
</compile_context>

<pallas_src>
import jax
import jax.numpy as jnp
from jax.experimental import pallas as pl
from jax.experimental.pallas import tpu as pltpu

TILE_B_MAX = 512     # batch tile (multiple of 8 sublanes / MXU rows)
K_PAD = 32           # pad input features to a small sublane multiple, not 128
NEG_BIAS = -1e30     # bias for padded logit columns -> exp() ~= 0 in the softmax


def _round_up(x, m):
    return (x + m - 1) // m * m


def mlp_kernel(x_ref, w1_ref, b1_ref, w2_ref, b2_ref, w3_ref, b3_ref, o_ref):
    # x already bf16 (host-side pad+cast); weights bf16; accumulation in f32.
    x = x_ref[...]

    # Layer 1: Linear(in_pad -> 256) + ReLU
    h1 = jnp.dot(x, w1_ref[...], preferred_element_type=jnp.float32) + b1_ref[...]
    h1 = jnp.maximum(h1, 0.0).astype(jnp.bfloat16)

    # Layer 2: Linear(256 -> 256) + ReLU
    h2 = jnp.dot(h1, w2_ref[...], preferred_element_type=jnp.float32) + b2_ref[...]
    h2 = jnp.maximum(h2, 0.0).astype(jnp.bfloat16)

    # Layer 3: Linear(256 -> out_pad). Padded columns carry bias NEG_BIAS so they
    # vanish under the softmax and the store stays lane-dense (128 columns).
    logits = jnp.dot(h2, w3_ref[...], preferred_element_type=jnp.float32) + b3_ref[...]

    # Numerically-stable softmax along axis 1 (feature axis).
    m = jnp.max(logits, axis=1, keepdims=True)
    e = jnp.exp(logits - m)
    denom = jnp.sum(e, axis=1, keepdims=True)
    o_ref[...] = (e * pl.reciprocal(denom, approx=True)).astype(o_ref.dtype)

    # TODO(synk): torch.isnan(...).any() -> host-side debug print has no clean
    # in-kernel equivalent (softmax here is numerically stable).


@jax.jit
def mlp_forward(x, w1, b1, w2, b2, w3, b3):
    batch, in_features = x.shape
    hidden = w1.shape[1]
    out_features = w3.shape[1]

    # Lane/sublane alignment: pad K to 32 (zeros), N to 128 (zeros in W3,
    # NEG_BIAS in b3 so padded columns die in the softmax).
    k_pad = _round_up(in_features, K_PAD)
    n_pad = _round_up(out_features, 128)

    # Batch tiling: at most TILE_B_MAX rows per grid step, always a multiple of 8.
    tile_b = min(TILE_B_MAX, _round_up(batch, 8))
    batch_pad = _round_up(batch, tile_b)
    grid = (batch_pad // tile_b,)

    # Host-side padding / dtype prep (x and weights to bf16 for the MXU,
    # biases stay f32).
    xp = jnp.zeros((batch_pad, k_pad), jnp.bfloat16).at[:batch, :in_features].set(
        x.astype(jnp.bfloat16))
    w1p = jnp.zeros((k_pad, hidden), jnp.bfloat16).at[:in_features, :].set(
        w1.astype(jnp.bfloat16))
    w2p = w2.astype(jnp.bfloat16)
    w3p = jnp.zeros((hidden, n_pad), jnp.bfloat16).at[:, :out_features].set(
        w3.astype(jnp.bfloat16))
    b3p = jnp.full((1, n_pad), NEG_BIAS, jnp.float32).at[:, :out_features].set(b3)

    resident = lambda shape: pl.BlockSpec(shape, lambda i: (0, 0))

    flops = 2 * batch_pad * (k_pad * hidden + hidden * hidden + hidden * n_pad)
    bytes_accessed = (xp.size * 2 + batch_pad * n_pad * 4
                      + (w1p.size + w2p.size + w3p.size) * 2
                      + (b1.size + b2.size + b3p.size) * 4)

    out = pl.pallas_call(
        mlp_kernel,
        out_shape=jax.ShapeDtypeStruct((batch_pad, n_pad), jnp.float32),
        grid_spec=pltpu.PrefetchScalarGridSpec(
            num_scalar_prefetch=0,
            grid=grid,
            in_specs=[
                pl.BlockSpec((tile_b, k_pad), lambda i: (i, 0)),     # x tile
                resident((k_pad, hidden)),  resident((1, hidden)),   # W1, b1
                resident((hidden, hidden)), resident((1, hidden)),   # W2, b2
                resident((hidden, n_pad)),  resident((1, n_pad)),    # W3, b3
            ],
            out_specs=pl.BlockSpec((tile_b, n_pad), lambda i: (i, 0)),
        ),
        compiler_params=pltpu.CompilerParams(
            dimension_semantics=("parallel",)),
        cost_estimate=pl.CostEstimate(
            flops=flops,
            transcendentals=batch_pad * n_pad,
            bytes_accessed=bytes_accessed),
    )(xp, w1p, b1, w2p, b2, w3p, b3p)

    return out[:batch, :out_features]


def init_params(key, input_size, hidden, output_size):
    # Deterministic synthetic init (PyTorch-Linear-like uniform fan-in scaling).
    # Weights stored as (in_features, out_features): kernel computes x @ W + b.
    ks = jax.random.split(key, 6)

    def lin(kw, kb, fan_in, fan_out):
        bound = 1.0 / jnp.sqrt(fan_in)
        w = jax.random.uniform(kw, (fan_in, fan_out), jnp.float32, -bound, bound)
        b = jax.random.uniform(kb, (1, fan_out), jnp.float32, -bound, bound)
        return w, b

    w1, b1 = lin(ks[0], ks[1], input_size, hidden)
    w2, b2 = lin(ks[2], ks[3], hidden, hidden)
    w3, b3 = lin(ks[4], ks[5], hidden, output_size)
    return w1, b1, w2, b2, w3, b3


def mlp_reference(x, w1, b1, w2, b2, w3, b3):
    h1 = jnp.maximum(x @ w1 + b1, 0.0)
    h2 = jnp.maximum(h1 @ w2 + b2, 0.0)
    return jax.nn.softmax(h2 @ w3 + b3, axis=1)


if __name__ == "__main__":
    # Shapes consistent with the module: width=4, height=4, num_skills=8
    width, height, num_skills = 4, 4, 8
    output_size = width * height            # 16
    input_size = output_size + num_skills   # 24
    batch = 2

    key = jax.random.PRNGKey(0)
    k_x, k_p = jax.random.split(key)

    x = jax.random.normal(k_x, (batch, input_size), jnp.float32)
    params = init_params(k_p, input_size, 256, output_size)

    y = mlp_forward(x, *params)
    y = jax.block_until_ready(y)

    # Sanity checks: shape, softmax rows sum to ~1, close to f32 reference.
    assert y.shape == (batch, output_size)
    assert bool(jnp.all(jnp.isfinite(y)))
    assert jnp.allclose(jnp.sum(y, axis=1), 1.0, atol=1e-2)
    y_ref = mlp_reference(x, *params)
    assert jnp.allclose(y, y_ref, atol=0.05)   # bf16 MXU inputs -> loose tolerance

    print("KERNEL_OK")
</pallas_src>

<mosaic_0001>
module attributes {stable_mosaic.version = 11 : i64} {
  func.func @mlp_kernel(%arg0: i32, %arg1: memref<8x32xbf16, #tpu.memory_space<vmem>>, %arg2: memref<32x256xbf16, #tpu.memory_space<vmem>>, %arg3: memref<1x256xf32, #tpu.memory_space<vmem>>, %arg4: memref<256x256xbf16, #tpu.memory_space<vmem>>, %arg5: memref<1x256xf32, #tpu.memory_space<vmem>>, %arg6: memref<256x128xbf16, #tpu.memory_space<vmem>>, %arg7: memref<1x128xf32, #tpu.memory_space<vmem>>, %arg8: memref<8x128xf32, #tpu.memory_space<vmem>>) attributes {dimension_semantics = [#tpu.dimension_semantics<parallel>], iteration_bounds = array<i64: 1>, scalar_prefetch = 0 : i64, scratch_operands = 0 : i64, tpu.core_type = #tpu.core_type<tc>, window_params = [{transform_indices = @transform_0, window_bounds = array<i64: 8, 32>}, {pipeline_mode = #tpu.pipeline_mode<synchronous>, transform_indices = @transform_1, window_bounds = array<i64: 32, 256>}, {pipeline_mode = #tpu.pipeline_mode<synchronous>, transform_indices = @transform_2, window_bounds = array<i64: 1, 256>}, {pipeline_mode = #tpu.pipeline_mode<synchronous>, transform_indices = @transform_3, window_bounds = array<i64: 256, 256>}, {pipeline_mode = #tpu.pipeline_mode<synchronous>, transform_indices = @transform_4, window_bounds = array<i64: 1, 256>}, {pipeline_mode = #tpu.pipeline_mode<synchronous>, transform_indices = @transform_5, window_bounds = array<i64: 256, 128>}, {pipeline_mode = #tpu.pipeline_mode<synchronous>, transform_indices = @transform_6, window_bounds = array<i64: 1, 128>}, {transform_indices = @transform_7, window_bounds = array<i64: 8, 128>}]} {
    %c0 = arith.constant 0 : index
    %c0_0 = arith.constant 0 : index
    %0 = vector.load %arg1[%c0, %c0_0] : memref<8x32xbf16, #tpu.memory_space<vmem>>, vector<8x32xbf16>
    %c0_1 = arith.constant 0 : index
    %c0_2 = arith.constant 0 : index
    %1 = vector.load %arg2[%c0_1, %c0_2] : memref<32x256xbf16, #tpu.memory_space<vmem>>, vector<32x256xbf16>
    %cst = arith.constant dense<0.000000e+00> : vector<8x256xf32>
    %2 = tpu.matmul %0, %1, %cst {dimension_numbers = #tpu.dot_dimension_numbers<[1], [0], [0], [1], [0, 0, 1, 1], [], []>} : vector<8x32xbf16>, vector<32x256xbf16>, vector<8x256xf32> -> vector<8x256xf32>
    %c0_3 = arith.constant 0 : index
    %c0_4 = arith.constant 0 : index
    %3 = vector.load %arg3[%c0_3, %c0_4] : memref<1x256xf32, #tpu.memory_space<vmem>>, vector<1x256xf32>
    %4 = vector.broadcast %3 : vector<1x256xf32> to vector<8x256xf32>
    %5 = arith.addf %2, %4 : vector<8x256xf32>
    %cst_5 = arith.constant 0.000000e+00 : f32
    %6 = vector.broadcast %cst_5 : f32 to vector<8x256xf32>
    %7 = arith.maximumf %5, %6 : vector<8x256xf32>
    %8 = arith.truncf %7 : vector<8x256xf32> to vector<8x256xbf16>
    %c0_6 = arith.constant 0 : index
    %c0_7 = arith.constant 0 : index
    %9 = vector.load %arg4[%c0_6, %c0_7] : memref<256x256xbf16, #tpu.memory_space<vmem>>, vector<256x256xbf16>
    %cst_8 = arith.constant dense<0.000000e+00> : vector<8x256xf32>
    %10 = tpu.matmul %8, %9, %cst_8 {dimension_numbers = #tpu.dot_dimension_numbers<[1], [0], [0], [1], [0, 0, 1, 1], [], []>} : vector<8x256xbf16>, vector<256x256xbf16>, vector<8x256xf32> -> vector<8x256xf32>
    %c0_9 = arith.constant 0 : index
    %c0_10 = arith.constant 0 : index
    %11 = vector.load %arg5[%c0_9, %c0_10] : memref<1x256xf32, #tpu.memory_space<vmem>>, vector<1x256xf32>
    %12 = vector.broadcast %11 : vector<1x256xf32> to vector<8x256xf32>
    %13 = arith.addf %10, %12 : vector<8x256xf32>
    %cst_11 = arith.constant 0.000000e+00 : f32
    %14 = vector.broadcast %cst_11 : f32 to vector<8x256xf32>
    %15 = arith.maximumf %13, %14 : vector<8x256xf32>
    %16 = arith.truncf %15 : vector<8x256xf32> to vector<8x256xbf16>
    %c0_12 = arith.constant 0 : index
    %c0_13 = arith.constant 0 : index
    %17 = vector.load %arg6[%c0_12, %c0_13] : memref<256x128xbf16, #tpu.memory_space<vmem>>, vector<256x128xbf16>
    %cst_14 = arith.constant dense<0.000000e+00> : vector<8x128xf32>
    %18 = tpu.matmul %16, %17, %cst_14 {dimension_numbers = #tpu.dot_dimension_numbers<[1], [0], [0], [1], [0, 0, 1, 1], [], []>} : vector<8x256xbf16>, vector<256x128xbf16>, vector<8x128xf32> -> vector<8x128xf32>
    %c0_15 = arith.constant 0 : index
    %c0_16 = arith.constant 0 : index
    %19 = vector.load %arg7[%c0_15, %c0_16] : memref<1x128xf32, #tpu.memory_space<vmem>>, vector<1x128xf32>
    %20 = vector.broadcast %19 : vector<1x128xf32> to vector<8x128xf32>
    %21 = arith.addf %18, %20 : vector<8x128xf32>
    %cst_17 = arith.constant dense<0xFF800000> : vector<8xf32>
    %22 = vector.multi_reduction <maximumf>, %21, %cst_17 [1] : vector<8x128xf32> to vector<8xf32>
    %23 = vector.shape_cast %22 : vector<8xf32> to vector<8x1xf32>
    %24 = vector.broadcast %23 : vector<8x1xf32> to vector<8x128xf32>
    %25 = arith.subf %21, %24 : vector<8x128xf32>
    %26 = math.exp %25 : vector<8x128xf32>
    %cst_18 = arith.constant dense<0.000000e+00> : vector<8xf32>
    %27 = vector.multi_reduction <add>, %26, %cst_18 [1] : vector<8x128xf32> to vector<8xf32>
    %28 = vector.shape_cast %27 : vector<8xf32> to vector<8x1xf32>
    %29 = tpu.reciprocal %28 {approx = true} : vector<8x1xf32> -> vector<8x1xf32>
    %30 = vector.broadcast %29 : vector<8x1xf32> to vector<8x128xf32>
    %31 = arith.mulf %26, %30 : vector<8x128xf32>
    %c0_19 = arith.constant 0 : index
    %c0_20 = arith.constant 0 : index
    %32 = vector.load %arg8[%c0_19, %c0_20] : memref<8x128xf32, #tpu.memory_space<vmem>>, vector<8x128xf32>
    tpu.vector_store %arg8[%c0_19, %c0_20], %31 {strides = array<i32>} : memref<8x128xf32, #tpu.memory_space<vmem>>, vector<8x128xf32>,
    return
  }
  func.func @transform_0(%arg0: i32) -> (i32, i32) {
    %c0_i32 = arith.constant 0 : i32
    %c0_i32_0 = arith.constant 0 : i32
    return %arg0, %c0_i32 : i32, i32
  }
  func.func @transform_1(%arg0: i32) -> (i32, i32) {
    %c0_i32 = arith.constant 0 : i32
    %c0_i32_0 = arith.constant 0 : i32
    %c0_i32_1 = arith.constant 0 : i32
    return %c0_i32, %c0_i32_0 : i32, i32
  }
  func.func @transform_2(%arg0: i32) -> (i32, i32) {
    %c0_i32 = arith.constant 0 : i32
    %c0_i32_0 = arith.constant 0 : i32
    %c0_i32_1 = arith.constant 0 : i32
    return %c0_i32, %c0_i32_0 : i32, i32
  }
  func.func @transform_3(%arg0: i32) -> (i32, i32) {
    %c0_i32 = arith.constant 0 : i32
    %c0_i32_0 = arith.constant 0 : i32
    %c0_i32_1 = arith.constant 0 : i32
    return %c0_i32, %c0_i32_0 : i32, i32
  }
  func.func @transform_4(%arg0: i32) -> (i32, i32) {
    %c0_i32 = arith.constant 0 : i32
    %c0_i32_0 = arith.constant 0 : i32
    %c0_i32_1 = arith.constant 0 : i32
    return %c0_i32, %c0_i32_0 : i32, i32
  }
  func.func @transform_5(%arg0: i32) -> (i32, i32) {
    %c0_i32 = arith.constant 0 : i32
    %c0_i32_0 = arith.constant 0 : i32
    %c0_i32_1 = arith.constant 0 : i32
    return %c0_i32, %c0_i32_0 : i32, i32
  }
  func.func @transform_6(%arg0: i32) -> (i32, i32) {
    %c0_i32 = arith.constant 0 : i32
    %c0_i32_0 = arith.constant 0 : i32
    %c0_i32_1 = arith.constant 0 : i32
    return %c0_i32, %c0_i32_0 : i32, i32
  }
  func.func @transform_7(%arg0: i32) -> (i32, i32) {
    %c0_i32 = arith.constant 0 : i32
    %c0_i32_0 = arith.constant 0 : i32
    return %arg0, %c0_i32 : i32, i32
  }
}

</mosaic_0001>

<llo_original>
// kernel: mlp_forward.1
$region0: #{mlp_forward.1}
  #allocation0 [shape = 'u32[]', space=smem, size = 0x4, offset = 0x4, fixed_abs, tag = 'smem constant byte address 0x4 - core index']
  #allocation1 [shape = 'u32[144,128]{1,0:T(1,128)}', space=vmem, size = 0x12000, scoped, tag = 'internal scratch']
  %s0 = inlined_call_operand.vmem [shape: bf16[8,32], index: 0, kind: input, shape index: {}]
  %s1 = inlined_call_operand.vmem [shape: bf16[32,256], index: 1, kind: input, shape index: {}]
  %s2 = inlined_call_operand.vmem [shape: f32[1,256], index: 2, kind: input, shape index: {}]
  %s3 = inlined_call_operand.vmem [shape: bf16[256,256], index: 3, kind: input, shape index: {}]
  %s4 = inlined_call_operand.vmem [shape: f32[1,256], index: 4, kind: input, shape index: {}]
  %s5 = inlined_call_operand.vmem [shape: bf16[256,128], index: 5, kind: input, shape index: {}]
  %s6 = inlined_call_operand.vmem [shape: f32[1,128], index: 6, kind: input, shape index: {}]
  %s7 = inlined_call_operand.vmem [shape: f32[8,128], index: 7, kind: output, shape index: {}]
  %s8 = sld [smem:[#allocation0]]
  $region38: #{mlp_forward.1} parent=0
    _
  %s10 = ssub.s32 1, %s8
  %s11 = scalar_select 0, %s10, %s8
  // Predicated region
  $region2: #{mlp_forward.1} parent=0 // pred_check
    _
  $region3: #{mlp_forward.1} parent=0 // pred_check_branch
    %13 = sbr.rel (0) target = $region5
  $region4: #{mlp_forward.1} parent=0 // pred_region
    _
  $region5: #{mlp_forward.1} parent=0 // pred_fallthru
    _
  // Predicated region
  $region6: #{mlp_forward.1} parent=0 // pred_check
    _
  $region7: #{mlp_forward.1} parent=0 // pred_check_branch
    %15 = sbr.rel (0) target = $region9
  $region8: #{mlp_forward.1} parent=0 // pred_region
    _
  $region9: #{mlp_forward.1} parent=0 // pred_fallthru
    _
  // Predicated region
  $region10: #{mlp_forward.1} parent=0 // pred_check
    _
  $region11: #{mlp_forward.1} parent=0 // pred_check_branch
    %17 = sbr.rel (0) target = $region13
  $region12: #{mlp_forward.1} parent=0 // pred_region
    _
  $region13: #{mlp_forward.1} parent=0 // pred_fallthru
    _
  // Predicated region
  $region14: #{mlp_forward.1} parent=0 // pred_check
    _
  $region15: #{mlp_forward.1} parent=0 // pred_check_branch
    %19 = sbr.rel (0) target = $region17
  $region16: #{mlp_forward.1} parent=0 // pred_region
    _
  $region17: #{mlp_forward.1} parent=0 // pred_fallthru
    _
  // Predicated region
  $region18: #{mlp_forward.1} parent=0 // pred_check
    _
  $region19: #{mlp_forward.1} parent=0 // pred_check_branch
    %21 = sbr.rel (0) target = $region21
  $region20: #{mlp_forward.1} parent=0 // pred_region
    _
  $region21: #{mlp_forward.1} parent=0 // pred_fallthru
    _
  // Predicated region
  $region22: #{mlp_forward.1} parent=0 // pred_check
    _
  $region23: #{mlp_forward.1} parent=0 // pred_check_branch
    %23 = sbr.rel (0) target = $region25
  $region24: #{mlp_forward.1} parent=0 // pred_region
    _
  $region25: #{mlp_forward.1} parent=0 // pred_fallthru
    _
  // Predicated region
  $region26: #{mlp_forward.1} parent=0 // pred_check
    _
  $region27: #{mlp_forward.1} parent=0 // pred_check_branch
    %25 = sbr.rel (0) target = $region29
  $region28: #{mlp_forward.1} parent=0 // pred_region
    _
  $region29: #{mlp_forward.1} parent=0 // pred_fallthru
    _
  %v27 = vld [vmem:[%s0] sm:$0xf]
  %v28 = vld [vmem:[%s1] sm:$0xff]
  %v29 = vld [vmem:[%s1 + $0x8] sm:$0xff]
  %v30 = vld [vmem:[%s1 + $0x10] sm:$0xff]
  %v31 = vld [vmem:[%s1 + $0x18] sm:$0xff]
  %v32 = vld [vmem:[%s2] sm:$0x3]
  %v34 = vlaneseq
  %v35 = vshrl.u32 %v34, 7
  %v36 = vsub.s32 0, %v35
  %v37 = vrot.slane %v32, %v36
  %v38 = vlaneseq
  %v39 = vshrl.u32 %v38, 7
  %v40 = vsub.s32 1, %v39
  %v41 = vrot.slane %v32, %v40
  %v48 = vunpack.c.l.b16 %v28
  %v49 = vunpack.c.h.b16 %v28
  %v50 = vunpack.c.l.b16 %v29
  %v51 = vunpack.c.h.b16 %v29
  %v52 = vunpack.c.l.b16 %v30
  %v53 = vunpack.c.h.b16 %v30
  %v54 = vunpack.c.l.b16 %v31
  %v55 = vunpack.c.h.b16 %v31
  %v56 = vpack.c.b16 %v50, %v48
  %v57 = vpack.c.b16 %v51, %v49
  %v58 = vpack.c.b16 %v54, %v52
  %v59 = vpack.c.b16 %v55, %v53
  %vm64 = vcmask 261120
  %v66 = vsel %vm64, %v27, 0
  %68 = vmatprep.subr.bf16.mxu0 0
  %69 = vmatpush1.bf16.msra.mxu0 0
  %70 = vmatprep.subr.bf16.mxu0 0
  %71 = vmatpush1.bf16.msra.mxu0 0
  %72 = vmatprep.subr.bf16.mxu0 0
  %73 = vmatpush1.bf16.msra.mxu0 0
  %74 = vmatprep.subr.bf16.mxu0 0
  %75 = vmatpush1.bf16.msra.mxu0 0
  %76 = vmatprep.subr.bf16.mxu0 0
  %77 = vmatpush1.bf16.msra.mxu0 0
  %78 = vmatprep.subr.bf16.mxu0 0
  %79 = vmatpush1.bf16.msra.mxu0 0
  %80 = vmatprep.subr.bf16.mxu0 %v59
  %81 = vmatpush1.bf16.msra.mxu0 %v58
  %82 = vmatprep.subr.bf16.mxu0 %v57
  %83 = vmatpush1.bf16.msra.mxu0 %v56
  %84 = vmatprep.subr.bf16.mxu0 0
  %85 = vmatpush2.bf16.msra.mxu0 0
  %86 = vmatprep.subr.bf16.mxu0 0
  %87 = vmatpush2.bf16.msra.mxu0 0
  %88 = vmatprep.subr.bf16.mxu0 0
  %89 = vmatpush2.bf16.msra.mxu0 0
  %90 = vmatprep.subr.bf16.mxu0 0
  %91 = vmatpush2.bf16.msra.mxu0 0
  %92 = vmatprep.subr.bf16.mxu0 0
  %93 = vmatpush2.bf16.msra.mxu0 0
  %94 = vmatprep.subr.bf16.mxu0 0
  %95 = vmatpush2.bf16.msra.mxu0 0
  %96 = vmatprep.subr.bf16.mxu0 0
  %97 = vmatpush2.bf16.msra.mxu0 0
  %98 = vmatprep.subr.bf16.mxu0 0
  %99 = vmatpush2.bf16.msra.mxu0 0
  %100 = vmatprep.mubr.bf16.mxu0 0
  %101 = vmatmul.mubr.bf16.gmra.mxu0 %v66
  %v102 = vpop.f32.mrf.mxu0
  %v103 = vadd.f32 %v37, %v102
  %v104 = vpop.f32.mrf.mxu0
  %v105 = vadd.f32 %v41, %v104
  %v106 = vpop.f32.mrf.mxu0
  %v107 = vpop.f32.mrf.mxu0
  %108 = vdwg.mxu0
  %v109 = vmax.f32 %v103, 0.0
  %v110 = vmax.f32 %v105, 0.0
  %v111 = vpack.c.bf16 %v109, %v109
  %v112 = vpack.c.bf16 %v110, %v110
  %v113 = vld [vmem:[%s3] sm:$0xff]
  %v114 = vld [vmem:[%s3 + $0x8] sm:$0xff]
  %v115 = vld [vmem:[%s3 + $0x10] sm:$0xff]
  %v116 = vld [vmem:[%s3 + $0x18] sm:$0xff]
  %v117 = vld [vmem:[%s3 + $0x20] sm:$0xff]
  %v118 = vld [vmem:[%s3 + $0x28] sm:$0xff]
  %v119 = vld [vmem:[%s3 + $0x30] sm:$0xff]
  %v120 = vld [vmem:[%s3 + $0x38] sm:$0xff]
  %v121 = vld [vmem:[%s3 + $0x40] sm:$0xff]
  %v122 = vld [vmem:[%s3 + $0x48] sm:$0xff]
  %v123 = vld [vmem:[%s3 + $0x50] sm:$0xff]
  %v124 = vld [vmem:[%s3 + $0x58] sm:$0xff]
  %v125 = vld [vmem:[%s3 + $0x60] sm:$0xff]
  %v126 = vld [vmem:[%s3 + $0x68] sm:$0xff]
  %v127 = vld [vmem:[%s3 + $0x70] sm:$0xff]
  %v128 = vld [vmem:[%s3 + $0x78] sm:$0xff]
  %v129 = vld [vmem:[%s3 + $0x80] sm:$0xff]
  %v130 = vld [vmem:[%s3 + $0x88] sm:$0xff]
  %v131 = vld [vmem:[%s3 + $0x90] sm:$0xff]
  %v132 = vld [vmem:[%s3 + $0x98] sm:$0xff]
  %v133 = vld [vmem:[%s3 + $0xa0] sm:$0xff]
  %v134 = vld [vmem:[%s3 + $0xa8] sm:$0xff]
  %v135 = vld [vmem:[%s3 + $0xb0] sm:$0xff]
  %v136 = vld [vmem:[%s3 + $0xb8] sm:$0xff]
  %v137 = vld [vmem:[%s3 + $0xc0] sm:$0xff]
  %v138 = vld [vmem:[%s3 + $0xc8] sm:$0xff]
  %v139 = vld [vmem:[%s3 + $0xd0] sm:$0xff]
  %v140 = vld [vmem:[%s3 + $0xd8] sm:$0xff]
  %v141 = vld [vmem:[%s3 + $0xe0] sm:$0xff]
  %v142 = vld [vmem:[%s3 + $0xe8] sm:$0xff]
  %v143 = vld [vmem:[%s3 + $0xf0] sm:$0xff]
  %v144 = vld [vmem:[%s3 + $0xf8] sm:$0xff]
  %v145 = vld [vmem:[%s4] sm:$0x3]
  %v147 = vlaneseq
  %v148 = vshrl.u32 %v147, 7
  %v149 = vsub.s32 0, %v148
  %v150 = vrot.slane %v145, %v149
  %v151 = vlaneseq
  %v152 = vshrl.u32 %v151, 7
  %v153 = vsub.s32 1, %v152
  %v154 = vrot.slane %v145, %v153
  %v189 = vunpack.c.l.b16 %v113
  %v190 = vunpack.c.h.b16 %v113
  %v191 = vunpack.c.l.b16 %v114
  %v192 = vunpack.c.h.b16 %v114
  %v193 = vunpack.c.l.b16 %v115
  %v194 = vunpack.c.h.b16 %v115
  %v195 = vunpack.c.l.b16 %v116
  %v196 = vunpack.c.h.b16 %v116
  %v197 = vunpack.c.l.b16 %v117
  %v198 = vunpack.c.h.b16 %v117
  %v199 = vunpack.c.l.b16 %v118
  %v200 = vunpack.c.h.b16 %v118
  %v201 = vunpack.c.l.b16 %v119
  %v202 = vunpack.c.h.b16 %v119
  %v203 = vunpack.c.l.b16 %v120
  %v204 = vunpack.c.h.b16 %v120
  %v205 = vunpack.c.l.b16 %v121
  %v206 = vunpack.c.h.b16 %v121
  %v207 = vunpack.c.l.b16 %v122
  %v208 = vunpack.c.h.b16 %v122
  %v209 = vunpack.c.l.b16 %v123
  %v210 = vunpack.c.h.b16 %v123
  %v211 = vunpack.c.l.b16 %v124
  %v212 = vunpack.c.h.b16 %v124
  %v213 = vunpack.c.l.b16 %v125
  %v214 = vunpack.c.h.b16 %v125
  %v215 = vunpack.c.l.b16 %v126
  %v216 = vunpack.c.h.b16 %v126
  %v217 = vunpack.c.l.b16 %v127
  %v218 = vunpack.c.h.b16 %v127
  %v219 = vunpack.c.l.b16 %v128
  %v220 = vunpack.c.h.b16 %v128
  %v221 = vunpack.c.l.b16 %v129
  %v222 = vunpack.c.h.b16 %v129
  %v223 = vunpack.c.l.b16 %v130
  %v224 = vunpack.c.h.b16 %v130
  %v225 = vunpack.c.l.b16 %v131
  %v226 = vunpack.c.h.b16 %v131
  %v227 = vunpack.c.l.b16 %v132
  %v228 = vunpack.c.h.b16 %v132
  %v229 = vunpack.c.l.b16 %v133
  %v230 = vunpack.c.h.b16 %v133
  %v231 = vunpack.c.l.b16 %v134
  %v232 = vunpack.c.h.b16 %v134
  %v233 = vunpack.c.l.b16 %v135
  %v234 = vunpack.c.h.b16 %v135
  %v235 = vunpack.c.l.b16 %v136
  %v236 = vunpack.c.h.b16 %v136
  %v237 = vunpack.c.l.b16 %v137
  %v238 = vunpack.c.h.b16 %v137
  %v239 = vunpack.c.l.b16 %v138
  %v240 = vunpack.c.h.b16 %v138
  %v241 = vunpack.c.l.b16 %v139
  %v242 = vunpack.c.h.b16 %v139
  %v243 = vunpack.c.l.b16 %v140
  %v244 = vunpack.c.h.b16 %v140
  %v245 = vunpack.c.l.b16 %v141
  %v246 = vunpack.c.h.b16 %v141
  %v247 = vunpack.c.l.b16 %v142
  %v248 = vunpack.c.h.b16 %v142
  %v249 = vunpack.c.l.b16 %v143
  %v250 = vunpack.c.h.b16 %v143
  %v251 = vunpack.c.l.b16 %v144
  %v252 = vunpack.c.h.b16 %v144
  %v253 = vpack.c.b16 %v191, %v189
  %v254 = vpack.c.b16 %v192, %v190
  %v255 = vpack.c.b16 %v195, %v193
  %v256 = vpack.c.b16 %v196, %v194
  %v257 = vpack.c.b16 %v199, %v197
  %v258 = vpack.c.b16 %v200, %v198
  %v259 = vpack.c.b16 %v203, %v201
  %v260 = vpack.c.b16 %v204, %v202
  %v261 = vpack.c.b16 %v207, %v205
  %v262 = vpack.c.b16 %v208, %v206
  %v263 = vpack.c.b16 %v211, %v209
  %v264 = vpack.c.b16 %v212, %v210
  %v265 = vpack.c.b16 %v215, %v213
  %v266 = vpack.c.b16 %v216, %v214
  %v267 = vpack.c.b16 %v219, %v217
  %v268 = vpack.c.b16 %v220, %v218
  %v269 = vpack.c.b16 %v223, %v221
  %v270 = vpack.c.b16 %v224, %v222
  %v271 = vpack.c.b16 %v227, %v225
  %v272 = vpack.c.b16 %v228, %v226
  %v273 = vpack.c.b16 %v231, %v229
  %v274 = vpack.c.b16 %v232, %v230
  %v275 = vpack.c.b16 %v235, %v233
  %v276 = vpack.c.b16 %v236, %v234
  %v277 = vpack.c.b16 %v239, %v237
  %v278 = vpack.c.b16 %v240, %v238
  %v279 = vpack.c.b16 %v243, %v241
  %v280 = vpack.c.b16 %v244, %v242
  %v281 = vpack.c.b16 %v247, %v245
  %v282 = vpack.c.b16 %v248, %v246
  %v283 = vpack.c.b16 %v251, %v249
  %v284 = vpack.c.b16 %v252, %v250
  %317 = vmatprep.subr.bf16.mxu0 %v268
  %318 = vmatpush1.bf16.msra.mxu0 %v267
  %319 = vmatprep.subr.bf16.mxu0 %v266
  %320 = vmatpush1.bf16.msra.mxu0 %v265
  %321 = vmatprep.subr.bf16.mxu0 %v264
  %322 = vmatpush1.bf16.msra.mxu0 %v263
  %323 = vmatprep.subr.bf16.mxu0 %v262
  %324 = vmatpush1.bf16.msra.mxu0 %v261
  %325 = vmatprep.subr.bf16.mxu0 %v260
  %326 = vmatpush1.bf16.msra.mxu0 %v259
  %327 = vmatprep.subr.bf16.mxu0 %v258
  %328 = vmatpush1.bf16.msra.mxu0 %v257
  %329 = vmatprep.subr.bf16.mxu0 %v256
  %330 = vmatpush1.bf16.msra.mxu0 %v255
  %331 = vmatprep.subr.bf16.mxu0 %v254
  %332 = vmatpush1.bf16.msra.mxu0 %v253
  %333 = vmatprep.subr.bf16.mxu0 %v284
  %334 = vmatpush2.bf16.msra.mxu0 %v283
  %335 = vmatprep.subr.bf16.mxu0 %v282
  %336 = vmatpush2.bf16.msra.mxu0 %v281
  %337 = vmatprep.subr.bf16.mxu0 %v280
  %338 = vmatpush2.bf16.msra.mxu0 %v279
  %339 = vmatprep.subr.bf16.mxu0 %v278
  %340 = vmatpush2.bf16.msra.mxu0 %v277
  %341 = vmatprep.subr.bf16.mxu0 %v276
  %342 = vmatpush2.bf16.msra.mxu0 %v275
  %343 = vmatprep.subr.bf16.mxu0 %v274
  %344 = vmatpush2.bf16.msra.mxu0 %v273
  %345 = vmatprep.subr.bf16.mxu0 %v272
  %346 = vmatpush2.bf16.msra.mxu0 %v271
  %347 = vmatprep.subr.bf16.mxu0 %v270
  %348 = vmatpush2.bf16.msra.mxu0 %v269
  %349 = vmatprep.mubr.bf16.mxu0 %v112
  %350 = vmatmul.mubr.bf16.gmra.mxu0 %v111
  %v351 = vpop.f32.mrf.mxu0
  %v352 = vadd.f32 %v150, %v351
  %v353 = vpop.f32.mrf.mxu0
  %v354 = vadd.f32 %v154, %v353
  %v355 = vpop.f32.mrf.mxu0
  %v356 = vpop.f32.mrf.mxu0
  %357 = vdwg.mxu0
  %v358 = vmax.f32 %v352, 0.0
  %v359 = vmax.f32 %v354, 0.0
  %v360 = vpack.c.bf16 %v358, %v358
  %v361 = vpack.c.bf16 %v359, %v359
  %v362 = vld [vmem:[%s5] sm:$0xf]
  %v363 = vld [vmem:[%s5 + $0x4] sm:$0xf]
  %v364 = vld [vmem:[%s5 + $0x8] sm:$0xf]
  %v365 = vld [vmem:[%s5 + $0xc] sm:$0xf]
  %v366 = vld [vmem:[%s5 + $0x10] sm:$0xf]
  %v367 = vld [vmem:[%s5 + $0x14] sm:$0xf]
  %v368 = vld [vmem:[%s5 + $0x18] sm:$0xf]
  %v369 = vld [vmem:[%s5 + $0x1c] sm:$0xf]
  %v370 = vld [vmem:[%s5 + $0x20] sm:$0xf]
  %v371 = vld [vmem:[%s5 + $0x24] sm:$0xf]
  %v372 = vld [vmem:[%s5 + $0x28] sm:$0xf]
  %v373 = vld [vmem:[%s5 + $0x2c] sm:$0xf]
  %v374 = vld [vmem:[%s5 + $0x30] sm:$0xf]
  %v375 = vld [vmem:[%s5 + $0x34] sm:$0xf]
  %v376 = vld [vmem:[%s5 + $0x38] sm:$0xf]
  %v377 = vld [vmem:[%s5 + $0x3c] sm:$0xf]
  %v378 = vld [vmem:[%s5 + $0x40] sm:$0xf]
  %v379 = vld [vmem:[%s5 + $0x44] sm:$0xf]
  %v380 = vld [vmem:[%s5 + $0x48] sm:$0xf]
  %v381 = vld [vmem:[%s5 + $0x4c] sm:$0xf]
  %v382 = vld [vmem:[%s5 + $0x50] sm:$0xf]
  %v383 = vld [vmem:[%s5 + $0x54] sm:$0xf]
  %v384 = vld [vmem:[%s5 + $0x58] sm:$0xf]
  %v385 = vld [vmem:[%s5 + $0x5c] sm:$0xf]
  %v386 = vld [vmem:[%s5 + $0x60] sm:$0xf]
  %v387 = vld [vmem:[%s5 + $0x64] sm:$0xf]
  %v388 = vld [vmem:[%s5 + $0x68] sm:$0xf]
  %v389 = vld [vmem:[%s5 + $0x6c] sm:$0xf]
  %v390 = vld [vmem:[%s5 + $0x70] sm:$0xf]
  %v391 = vld [vmem:[%s5 + $0x74] sm:$0xf]
  %v392 = vld [vmem:[%s5 + $0x78] sm:$0xf]
  %v393 = vld [vmem:[%s5 + $0x7c] sm:$0xf]
  %v394 = vld [vmem:[%s6] sm:$0x1]
  %v396 = vlaneseq
  %v397 = vshrl.u32 %v396, 7
  %v398 = vsub.s32 0, %v397
  %v399 = vrot.slane %v394, %v398
  %v433 = vunpack.c.l.b16 %v362
  %v434 = vunpack.c.l.b16 %v363
  %v435 = vunpack.c.l.b16 %v364
  %v436 = vunpack.c.l.b16 %v365
  %v437 = vunpack.c.l.b16 %v366
  %v438 = vunpack.c.l.b16 %v367
  %v439 = vunpack.c.l.b16 %v368
  %v440 = vunpack.c.l.b16 %v369
  %v441 = vunpack.c.l.b16 %v370
  %v442 = vunpack.c.l.b16 %v371
  %v443 = vunpack.c.l.b16 %v372
  %v444 = vunpack.c.l.b16 %v373
  %v445 = vunpack.c.l.b16 %v374
  %v446 = vunpack.c.l.b16 %v375
  %v447 = vunpack.c.l.b16 %v376
  %v448 = vunpack.c.l.b16 %v377
  %v449 = vunpack.c.l.b16 %v378
  %v450 = vunpack.c.l.b16 %v379
  %v451 = vunpack.c.l.b16 %v380
  %v452 = vunpack.c.l.b16 %v381
  %v453 = vunpack.c.l.b16 %v382
  %v454 = vunpack.c.l.b16 %v383
  %v455 = vunpack.c.l.b16 %v384
  %v456 = vunpack.c.l.b16 %v385
  %v457 = vunpack.c.l.b16 %v386
  %v458 = vunpack.c.l.b16 %v387
  %v459 = vunpack.c.l.b16 %v388
  %v460 = vunpack.c.l.b16 %v389
  %v461 = vunpack.c.l.b16 %v390
  %v462 = vunpack.c.l.b16 %v391
  %v463 = vunpack.c.l.b16 %v392
  %v464 = vunpack.c.l.b16 %v393
  %v465 = vpack.c.b16 %v434, %v433
  %v466 = vpack.c.b16 %v436, %v435
  %v467 = vpack.c.b16 %v438, %v437
  %v468 = vpack.c.b16 %v440, %v439
  %v469 = vpack.c.b16 %v442, %v441
  %v470 = vpack.c.b16 %v444, %v443
  %v471 = vpack.c.b16 %v446, %v445
  %v472 = vpack.c.b16 %v448, %v447
  %v473 = vpack.c.b16 %v450, %v449
  %v474 = vpack.c.b16 %v452, %v451
  %v475 = vpack.c.b16 %v454, %v453
  %v476 = vpack.c.b16 %v456, %v455
  %v477 = vpack.c.b16 %v458, %v457
  %v478 = vpack.c.b16 %v460, %v459
  %v479 = vpack.c.b16 %v462, %v461
  %v480 = vpack.c.b16 %v464, %v463
  %497 = vmatprep.subr.bf16.mxu0 0
  %498 = vmatpush1.bf16.msra.mxu0 %v472
  %499 = vmatprep.subr.bf16.mxu0 0
  %500 = vmatpush1.bf16.msra.mxu0 %v471
  %501 = vmatprep.subr.bf16.mxu0 0
  %502 = vmatpush1.bf16.msra.mxu0 %v470
  %503 = vmatprep.subr.bf16.mxu0 0
  %504 = vmatpush1.bf16.msra.mxu0 %v469
  %505 = vmatprep.subr.bf16.mxu0 0
  %506 = vmatpush1.bf16.msra.mxu0 %v468
  %507 = vmatprep.subr.bf16.mxu0 0
  %508 = vmatpush1.bf16.msra.mxu0 %v467
  %509 = vmatprep.subr.bf16.mxu0 0
  %510 = vmatpush1.bf16.msra.mxu0 %v466
  %511 = vmatprep.subr.bf16.mxu0 0
  %512 = vmatpush1.bf16.msra.mxu0 %v465
  %513 = vmatprep.subr.bf16.mxu0 0
  %514 = vmatpush2.bf16.msra.mxu0 %v480
  %515 = vmatprep.subr.bf16.mxu0 0
  %516 = vmatpush2.bf16.msra.mxu0 %v479
  %517 = vmatprep.subr.bf16.mxu0 0
  %518 = vmatpush2.bf16.msra.mxu0 %v478
  %519 = vmatprep.subr.bf16.mxu0 0
  %520 = vmatpush2.bf16.msra.mxu0 %v477
  %521 = vmatprep.subr.bf16.mxu0 0
  %522 = vmatpush2.bf16.msra.mxu0 %v476
  %523 = vmatprep.subr.bf16.mxu0 0
  %524 = vmatpush2.bf16.msra.mxu0 %v475
  %525 = vmatprep.subr.bf16.mxu0 0
  %526 = vmatpush2.bf16.msra.mxu0 %v474
  %527 = vmatprep.subr.bf16.mxu0 0
  %528 = vmatpush2.bf16.msra.mxu0 %v473
  %529 = vmatprep.mubr.bf16.mxu0 %v361
  %530 = vmatmul.mubr.bf16.gmra.mxu0 %v360
  %v531 = vpop.f32.mrf.mxu0
  %v532 = vadd.f32 %v399, %v531
  %v533 = vpop.f32.mrf.mxu0
  %v534 = vpop.f32.mrf.mxu0
  %v535 = vpop.f32.mrf.mxu0
  %536 = vdwg.mxu0
  %537 = vmax.xlane.f32.xlu0 %v532
  %v538 = vpop.xlane.xlu0 %537
  %v539 = vsub.f32 %v532, %v538
  %v540 = vmul.f32 %v539, 1.442695
  %v541 = vpow.pop %v540
  %542 = vadd.xlane.f32.xlu0 %v541
  %v543 = vpop.xlane.xlu0 %542
  %v544 = vrcp.pop %v543
  %v545 = vmul.f32 %v541, %v544
  %546 = vst [vmem:[%s7] sm:$0xff] %v545
  // Predicated region
  $region30: #{mlp_forward.1} parent=0 // pred_check
    _
  $region31: #{mlp_forward.1} parent=0 // pred_check_branch
    %548 = sbr.rel (0) target = $region33
  $region32: #{mlp_forward.1} parent=0 // pred_region
    _
  $region33: #{mlp_forward.1} parent=0 // pred_fallthru
    _
  // Predicated region
  $region34: #{mlp_forward.1} parent=0 // pred_check
    _
  $region35: #{mlp_forward.1} parent=0 // pred_check_branch
    %550 = sbr.rel (0) target = $region37
  $region36: #{mlp_forward.1} parent=0 // pred_region
    _
  $region37: #{mlp_forward.1} parent=0 // pred_fallthru
    _

</llo_original>
